<compile_context>
chip_gen: v6e
topology: v6e:2x2x1
jax: 0.10.0
libtpu: 0.0.40
codegen_flags: <defaults>
</compile_context>

<pallas_src>
import functools

import jax
import jax.numpy as jnp
from jax.experimental import pallas as pl
from jax.experimental.pallas import tpu as pltpu


def make_divisible(v, divisor=8, min_value=None):
    min_value = min_value or divisor
    new_v = max(min_value, int(v + divisor / 2) // divisor * divisor)
    if new_v < 0.9 * v:
        new_v += divisor
    return new_v


def _se_kernel(x_ref, w1t_ref, b1_ref, w2t_ref, b2_ref, o_ref, acc_ref, *, inv_l):
    """Grid: (n_tiles, l_tiles). acc_ref holds the running sum over L."""
    l_step = pl.program_id(1)

    @pl.when(l_step == 0)
    def _():
        acc_ref[...] = jnp.zeros_like(acc_ref)

    # Partial sum over this L tile, accumulated in f32 (safe for bf16 inputs).
    acc_ref[...] += jnp.sum(x_ref[...], axis=-1, dtype=jnp.float32)

    @pl.when(l_step == pl.num_programs(1) - 1)
    def _():
        pooled = acc_ref[...] * inv_l                                    # (Nt, C)
        # fc1: 1x1 Conv1d == matmul (weights pre-transposed in wrapper) + ReLU
        h = jnp.dot(pooled, w1t_ref[...],
                    preferred_element_type=jnp.float32) + b1_ref[...]     # (Nt, Cr)
        h = jnp.maximum(h, 0.0)
        # fc2 + sigmoid
        y = jnp.dot(h, w2t_ref[...],
                    preferred_element_type=jnp.float32) + b2_ref[...]     # (Nt, C)
        o_ref[...] = jax.nn.sigmoid(y).astype(o_ref.dtype)


def _choose_tiles(n, c, l, itemsize):
    """Pick (n_tile, l_tile) so a double-buffered x window stays <= ~12 MiB."""
    n_tile = n if n <= 8 else 8
    per_buffer_budget = 6 * 1024 * 1024  # 2 buffers -> ~12 MiB; fits v5e/v7x defaults
    lanes = (per_buffer_budget // max(1, n_tile * c * itemsize)) // 128 * 128
    l_tile = max(128, min(lanes, 4096))
    if l <= l_tile:
        l_tile = l  # full-extent block (always legal), grid over L collapses to 1
    return n_tile, l_tile


def squeeze_excitation(x, w1, b1, w2, b2):
    """x: (N, C, L). w1: (Cr, C), b1: (1, Cr), w2: (C, Cr), b2: (1, C).

    Returns the SE gate of shape (N, C, 1), matching the torch module output.
    """
    n, c, l = x.shape
    cr = w1.shape[0]
    itemsize = jnp.dtype(x.dtype).itemsize

    # Layout plumbing in the wrapper (free at trace time): drop in-kernel .T.
    w1t = w1.T  # (C, Cr)
    w2t = w2.T  # (Cr, C)

    n_tile, l_tile = _choose_tiles(n, c, l, itemsize)

    # Zero-pad N / L remainders; zeros do not perturb the sum and we divide by
    # the TRUE L, so the mean (and the gate) stays exact. Padded rows are
    # sliced off below.
    n_pad = (-n) % n_tile
    l_pad = (-l) % l_tile
    if n_pad or l_pad:
        x = jnp.pad(x, ((0, n_pad), (0, 0), (0, l_pad)))
    n_p, l_p = n + n_pad, l + l_pad

    grid = (n_p // n_tile, l_p // l_tile)
    inv_l = 1.0 / float(l)

    kernel = functools.partial(_se_kernel, inv_l=inv_l)

    cost = pl.CostEstimate(
        flops=4 * n * c * cr,              # two tiny FC matmuls
        transcendentals=n * c,             # sigmoid
        bytes_accessed=n * c * l * itemsize + (2 * c * cr + c + cr) * 4 + n * c * itemsize,
    )

    out = pl.pallas_call(
        kernel,
        out_shape=jax.ShapeDtypeStruct((n_p, c), x.dtype),
        grid_spec=pltpu.PrefetchScalarGridSpec(
            num_scalar_prefetch=0,
            grid=grid,
            in_specs=[
                pl.BlockSpec((n_tile, c, l_tile), lambda i, j: (i, 0, j)),
                pl.BlockSpec((c, cr), lambda i, j: (0, 0)),
                pl.BlockSpec((1, cr), lambda i, j: (0, 0)),
                pl.BlockSpec((cr, c), lambda i, j: (0, 0)),
                pl.BlockSpec((1, c), lambda i, j: (0, 0)),
            ],
            out_specs=pl.BlockSpec((n_tile, c), lambda i, j: (i, 0)),
            scratch_shapes=[pltpu.VMEM((n_tile, c), jnp.float32)],
        ),
        compiler_params=pltpu.CompilerParams(
            dimension_semantics=("parallel", "arbitrary"),
        ),
        cost_estimate=cost,
    )(x, w1t, b1, w2t, b2)

    if n_pad:
        out = out[:n]
    return out.reshape(n, c, 1)


def init_params(key, in_channels, reduction=4, out_channels=-1):
    num_reduced = make_divisible(max(out_channels, 8) // reduction, 8)
    k1, k2, k3, k4 = jax.random.split(key, 4)
    # Shapes match nn.Conv1d weights with kernel_size=1 squeezed.
    w1 = 0.1 * jax.random.normal(k1, (num_reduced, in_channels), jnp.float32)
    b1 = 0.1 * jax.random.normal(k2, (1, num_reduced), jnp.float32)
    w2 = 0.1 * jax.random.normal(k3, (in_channels, num_reduced), jnp.float32)
    b2 = 0.1 * jax.random.normal(k4, (1, in_channels), jnp.float32)
    return w1, b1, w2, b2


def reference(x, w1, b1, w2, b2):
    pooled = jnp.mean(x, axis=-1)
    h = jnp.maximum(pooled @ w1.T + b1, 0.0)
    return jax.nn.sigmoid(h @ w2.T + b2)[..., None]


if __name__ == "__main__":
    key = jax.random.PRNGKey(0)
    kx, kp = jax.random.split(key)

    N, C, L = 2, 16, 16          # batch, in_channels, sequence length
    x = jax.random.normal(kx, (N, C, L), jnp.float32)

    w1, b1, w2, b2 = init_params(kp, in_channels=C, reduction=4, out_channels=-1)

    out = squeeze_excitation(x, w1, b1, w2, b2)
    out = jax.block_until_ready(out)

    ref = reference(x, w1, b1, w2, b2)
    assert out.shape == (N, C, 1)
    assert jnp.allclose(out, ref, atol=1e-5, rtol=1e-5)

    # Exercise the tiled + padded path too (L not a multiple of the tile).
    N2, C2, L2 = 3, 16, 400
    x2 = jax.random.normal(kx, (N2, C2, L2), jnp.float32)
    out2 = jax.block_until_ready(squeeze_excitation(x2, w1, b1, w2, b2))
    ref2 = reference(x2, w1, b1, w2, b2)
    assert out2.shape == (N2, C2, 1)
    assert jnp.allclose(out2, ref2, atol=1e-5, rtol=1e-5)

    print("KERNEL_OK")
</pallas_src>

<mosaic_0001>
module attributes {stable_mosaic.version = 11 : i64} {
  func.func @_se_kernel(%arg0: i32, %arg1: i32, %arg2: memref<2x16x16xf32, #tpu.memory_space<vmem>>, %arg3: memref<16x8xf32, #tpu.memory_space<vmem>>, %arg4: memref<1x8xf32, #tpu.memory_space<vmem>>, %arg5: memref<8x16xf32, #tpu.memory_space<vmem>>, %arg6: memref<1x16xf32, #tpu.memory_space<vmem>>, %arg7: memref<2x16xf32, #tpu.memory_space<vmem>>, %arg8: memref<2x16xf32, #tpu.memory_space<vmem>>) attributes {dimension_semantics = [#tpu.dimension_semantics<parallel>, #tpu.dimension_semantics<arbitrary>], iteration_bounds = array<i64: 1, 1>, scalar_prefetch = 0 : i64, scratch_operands = 1 : i64, tpu.core_type = #tpu.core_type<tc>, window_params = [{transform_indices = @transform_0, window_bounds = array<i64: 2, 16, 16>}, {pipeline_mode = #tpu.pipeline_mode<synchronous>, transform_indices = @transform_1, window_bounds = array<i64: 16, 8>}, {pipeline_mode = #tpu.pipeline_mode<synchronous>, transform_indices = @transform_2, window_bounds = array<i64: 1, 8>}, {pipeline_mode = #tpu.pipeline_mode<synchronous>, transform_indices = @transform_3, window_bounds = array<i64: 8, 16>}, {pipeline_mode = #tpu.pipeline_mode<synchronous>, transform_indices = @transform_4, window_bounds = array<i64: 1, 16>}, {transform_indices = @transform_5, window_bounds = array<i64: 2, 16>}]} {
    %c0_i32 = arith.constant 0 : i32
    %0 = arith.cmpi eq, %arg1, %c0_i32 : i32
    %1 = arith.extui %0 : i1 to i32
    %c0_i32_0 = arith.constant 0 : i32
    %2 = arith.cmpi ne, %1, %c0_i32_0 : i32
    scf.if %2 {
      %cst_9 = arith.constant 0.000000e+00 : f32
      %11 = vector.broadcast %cst_9 : f32 to vector<2x16xf32>
      %c0_10 = arith.constant 0 : index
      %c0_11 = arith.constant 0 : index
      %12 = vector.load %arg8[%c0_10, %c0_11] : memref<2x16xf32, #tpu.memory_space<vmem>>, vector<2x16xf32>
      tpu.vector_store %arg8[%c0_10, %c0_11], %11 {strides = array<i32>} : memref<2x16xf32, #tpu.memory_space<vmem>>, vector<2x16xf32>,
    } else {
    }
    %c0 = arith.constant 0 : index
    %c0_1 = arith.constant 0 : index
    %3 = vector.load %arg8[%c0, %c0_1] : memref<2x16xf32, #tpu.memory_space<vmem>>, vector<2x16xf32>
    %c0_2 = arith.constant 0 : index
    %c0_3 = arith.constant 0 : index
    %c0_4 = arith.constant 0 : index
    %4 = vector.load %arg2[%c0_2, %c0_3, %c0_4] : memref<2x16x16xf32, #tpu.memory_space<vmem>>, vector<2x16x16xf32>
    %cst = arith.constant dense<0.000000e+00> : vector<2x16xf32>
    %5 = vector.multi_reduction <add>, %4, %cst [2] : vector<2x16x16xf32> to vector<2x16xf32>
    %6 = arith.addf %3, %5 : vector<2x16xf32>
    %c0_5 = arith.constant 0 : index
    %c0_6 = arith.constant 0 : index
    %7 = vector.load %arg8[%c0_5, %c0_6] : memref<2x16xf32, #tpu.memory_space<vmem>>, vector<2x16xf32>
    tpu.vector_store %arg8[%c0_5, %c0_6], %6 {strides = array<i32>} : memref<2x16xf32, #tpu.memory_space<vmem>>, vector<2x16xf32>,
    %c0_i32_7 = arith.constant 0 : i32
    %8 = arith.cmpi eq, %arg1, %c0_i32_7 : i32
    %9 = arith.extui %8 : i1 to i32
    %c0_i32_8 = arith.constant 0 : i32
    %10 = arith.cmpi ne, %9, %c0_i32_8 : i32
    scf.if %10 {
      %c0_9 = arith.constant 0 : index
      %c0_10 = arith.constant 0 : index
      %11 = vector.load %arg8[%c0_9, %c0_10] : memref<2x16xf32, #tpu.memory_space<vmem>>, vector<2x16xf32>
      %cst_11 = arith.constant 6.250000e-02 : f32
      %12 = vector.broadcast %cst_11 : f32 to vector<2x16xf32>
      %13 = arith.mulf %11, %12 : vector<2x16xf32>
      %c0_12 = arith.constant 0 : index
      %c0_13 = arith.constant 0 : index
      %14 = vector.load %arg3[%c0_12, %c0_13] : memref<16x8xf32, #tpu.memory_space<vmem>>, vector<16x8xf32>
      %cst_14 = arith.constant dense<0.000000e+00> : vector<2x8xf32>
      %15 = tpu.matmul %13, %14, %cst_14 {dimension_numbers = #tpu.dot_dimension_numbers<[1], [0], [0], [1], [0, 0, 1, 1], [], []>} : vector<2x16xf32>, vector<16x8xf32>, vector<2x8xf32> -> vector<2x8xf32>
      %c0_15 = arith.constant 0 : index
      %c0_16 = arith.constant 0 : index
      %16 = vector.load %arg4[%c0_15, %c0_16] : memref<1x8xf32, #tpu.memory_space<vmem>>, vector<1x8xf32>
      %17 = vector.broadcast %16 : vector<1x8xf32> to vector<2x8xf32>
      %18 = arith.addf %15, %17 : vector<2x8xf32>
      %cst_17 = arith.constant 0.000000e+00 : f32
      %19 = vector.broadcast %cst_17 : f32 to vector<2x8xf32>
      %20 = arith.maximumf %18, %19 : vector<2x8xf32>
      %c0_18 = arith.constant 0 : index
      %c0_19 = arith.constant 0 : index
      %21 = vector.load %arg5[%c0_18, %c0_19] : memref<8x16xf32, #tpu.memory_space<vmem>>, vector<8x16xf32>
      %cst_20 = arith.constant dense<0.000000e+00> : vector<2x16xf32>
      %22 = tpu.matmul %20, %21, %cst_20 {dimension_numbers = #tpu.dot_dimension_numbers<[1], [0], [0], [1], [0, 0, 1, 1], [], []>} : vector<2x8xf32>, vector<8x16xf32>, vector<2x16xf32> -> vector<2x16xf32>
      %c0_21 = arith.constant 0 : index
      %c0_22 = arith.constant 0 : index
      %23 = vector.load %arg6[%c0_21, %c0_22] : memref<1x16xf32, #tpu.memory_space<vmem>>, vector<1x16xf32>
      %24 = vector.broadcast %23 : vector<1x16xf32> to vector<2x16xf32>
      %25 = arith.addf %22, %24 : vector<2x16xf32>
      %26 = arith.negf %25 : vector<2x16xf32>
      %27 = math.exp %26 : vector<2x16xf32>
      %cst_23 = arith.constant 1.000000e+00 : f32
      %28 = vector.broadcast %cst_23 : f32 to vector<2x16xf32>
      %29 = arith.addf %28, %27 : vector<2x16xf32>
      %30 = arith.divf %28, %29 : vector<2x16xf32>
      %c0_24 = arith.constant 0 : index
      %c0_25 = arith.constant 0 : index
      %31 = vector.load %arg7[%c0_24, %c0_25] : memref<2x16xf32, #tpu.memory_space<vmem>>, vector<2x16xf32>
      tpu.vector_store %arg7[%c0_24, %c0_25], %30 {strides = array<i32>} : memref<2x16xf32, #tpu.memory_space<vmem>>, vector<2x16xf32>,
    } else {
    }
    return
  }
  func.func @transform_0(%arg0: i32, %arg1: i32) -> (i32, i32, i32) {
    %c0_i32 = arith.constant 0 : i32
    %c0_i32_0 = arith.constant 0 : i32
    return %arg0, %c0_i32, %arg1 : i32, i32, i32
  }
  func.func @transform_1(%arg0: i32, %arg1: i32) -> (i32, i32) {
    %c0_i32 = arith.constant 0 : i32
    %c0_i32_0 = arith.constant 0 : i32
    %c0_i32_1 = arith.constant 0 : i32
    return %c0_i32, %c0_i32_0 : i32, i32
  }
  func.func @transform_2(%arg0: i32, %arg1: i32) -> (i32, i32) {
    %c0_i32 = arith.constant 0 : i32
    %c0_i32_0 = arith.constant 0 : i32
    %c0_i32_1 = arith.constant 0 : i32
    return %c0_i32, %c0_i32_0 : i32, i32
  }
  func.func @transform_3(%arg0: i32, %arg1: i32) -> (i32, i32) {
    %c0_i32 = arith.constant 0 : i32
    %c0_i32_0 = arith.constant 0 : i32
    %c0_i32_1 = arith.constant 0 : i32
    return %c0_i32, %c0_i32_0 : i32, i32
  }
  func.func @transform_4(%arg0: i32, %arg1: i32) -> (i32, i32) {
    %c0_i32 = arith.constant 0 : i32
    %c0_i32_0 = arith.constant 0 : i32
    %c0_i32_1 = arith.constant 0 : i32
    return %c0_i32, %c0_i32_0 : i32, i32
  }
  func.func @transform_5(%arg0: i32, %arg1: i32) -> (i32, i32) {
    %c0_i32 = arith.constant 0 : i32
    %c0_i32_0 = arith.constant 0 : i32
    return %arg0, %c0_i32 : i32, i32
  }
}

</mosaic_0001>

<llo_original>
// kernel: tpu_custom_call.1
$region0: #{tpu_custom_call.1}
  #allocation0 [shape = 'u32[]', space=smem, size = 0x4, offset = 0x4, fixed_abs, tag = 'smem constant byte address 0x4 - core index']
  #allocation1 [shape = 'u32[144,128]{1,0:T(1,128)}', space=vmem, size = 0x12000, scoped, tag = 'internal scratch']
  #allocation2 [shape = 'f32[2,16]{1,0:T(2,128)}', space=vmem, size = 0x400, scoped, tag = 'scratch operand']
  %s0 = inlined_call_operand.hbm [shape: f32[2,16,16], index: 0, kind: input, shape index: {}]
  %s1 = inlined_call_operand.vmem [shape: f32[16,8], index: 1, kind: input, shape index: {}]
  %s2 = inlined_call_operand.vmem [shape: f32[1,8], index: 2, kind: input, shape index: {}]
  %s3 = inlined_call_operand.vmem [shape: f32[8,16], index: 3, kind: input, shape index: {}]
  %s4 = inlined_call_operand.vmem [shape: f32[1,16], index: 4, kind: input, shape index: {}]
  %s5 = inlined_call_operand.hbm [shape: f32[2,16], index: 5, kind: output, shape index: {}]
  %s6 = sld [smem:[#allocation0]]
  $region42: #{tpu_custom_call.1} parent=0
    _
  %s8 = ssub.s32 1, %s6
  %s9 = scalar_select 0, %s8, %s6
  $region1: #{tpu_custom_call.1} parent=0
    #allocation3 [shape = 'u8[16384]{0}', space=vmem, size = 0x4000, scoped, tag = 'input window, operand 0, single buffered']
    #allocation4 [shape = 's32[1]{0}', space=sflag, size = 0x4, scoped, tag = 'scoped memory for tpu_custom_call.1']
    #allocation5 [shape = 's32[1]{0}', space=sflag, size = 0x4, scoped, tag = 'scoped memory for tpu_custom_call.1']
    #allocation6 [shape = 'u8[1024]{0}', space=vmem, size = 0x400, scoped, tag = 'output window, operand 0, single buffered']
    %10 = vsyncpa [#allocation4], 0
    %11 = vsyncpa [#allocation5], 0
    // Predicated region
    $region2: #{tpu_custom_call.1} parent=1 // pred_check
      _
    $region3: #{tpu_custom_call.1} parent=1 // pred_check_branch
      %13 = sbr.rel (0) target = $region5
    $region4: #{tpu_custom_call.1} parent=1 // pred_region
      %s15 = ssub.s32 512, 512
      %16 = vsyncadd [#allocation4], %s15
      %s17 = sshll.u32 [#allocation3], 4
      %s18 = int_to_ptr.vmem [resolvable:$true] %s17
      %23 = dma.hbm_to_vmem [thread:$0]  %s0, 512, %s18, [#allocation4], 128, 128, 8
    $region5: #{tpu_custom_call.1} parent=1 // pred_fallthru
      _
    // Predicated region
    $region6: #{tpu_custom_call.1} parent=1 // pred_check
      _
    $region7: #{tpu_custom_call.1} parent=1 // pred_check_branch
      %25 = sbr.rel (0) target = $region9
    $region8: #{tpu_custom_call.1} parent=1 // pred_region
      _
    $region9: #{tpu_custom_call.1} parent=1 // pred_fallthru
      _
    // Predicated region
    $region10: #{tpu_custom_call.1} parent=1 // pred_check
      _
    $region11: #{tpu_custom_call.1} parent=1 // pred_check_branch
      %27 = sbr.rel (0) target = $region13
    $region12: #{tpu_custom_call.1} parent=1 // pred_region
      _
    $region13: #{tpu_custom_call.1} parent=1 // pred_fallthru
      _
    // Predicated region
    $region14: #{tpu_custom_call.1} parent=1 // pred_check
      _
    $region15: #{tpu_custom_call.1} parent=1 // pred_check_branch
      %29 = sbr.rel (0) target = $region17
    $region16: #{tpu_custom_call.1} parent=1 // pred_region
      _
    $region17: #{tpu_custom_call.1} parent=1 // pred_fallthru
      _
    // Predicated region
    $region18: #{tpu_custom_call.1} parent=1 // pred_check
      _
    $region19: #{tpu_custom_call.1} parent=1 // pred_check_branch
      %31 = sbr.rel (0) target = $region21
    $region20: #{tpu_custom_call.1} parent=1 // pred_region
      _
    $region21: #{tpu_custom_call.1} parent=1 // pred_fallthru
      _
    // Predicated region
    $region22: #{tpu_custom_call.1} parent=1 // pred_check
      _
    $region23: #{tpu_custom_call.1} parent=1 // pred_check_branch
      %33 = sbr.rel (0) target = $region25
    $region24: #{tpu_custom_call.1} parent=1 // pred_region
      %34 = dma.done [#allocation4], 512
    $region25: #{tpu_custom_call.1} parent=1 // pred_fallthru
      _
    %p35 = scmp.eq.s32.totalorder 0, 0
    // Predicated region
    $region26: #{tpu_custom_call.1} parent=1 // pred_check
      %p36 = pneg %p35
    $region27: #{tpu_custom_call.1} parent=1 // pred_check_branch
      %38 = sbr.rel (%p36) target = $region29
    $region28: #{tpu_custom_call.1} parent=1 // pred_region
      %vm39 = vcmask 123904
      %40 = vst.msk [vmem:[#allocation2] sm:$0x3] %vm39, 0.0
    $region29: #{tpu_custom_call.1} parent=1 // pred_fallthru
      _
    %v41 = vld [vmem:[#allocation2] sm:$0x3]
    %v42 = vld [vmem:[#allocation3] sm:$0xff]
    %v43 = vld [vmem:[#allocation3 + $0x8] sm:$0xff]
    %v44 = vld [vmem:[#allocation3 + $0x10] sm:$0xff]
    %v45 = vld [vmem:[#allocation3 + $0x18] sm:$0xff]
    %vm46 = vcmask 130048
    %v47 = vsel %vm46, %v42, 0.0
    %48 = vadd.xlane.f32.xlu0 %v47
    %v49 = vpop.xlane.xlu0 %48
    %v50 = vsel %vm46, %v43, 0.0
    %51 = vadd.xlane.f32.xlu0 %v50
    %v52 = vpop.xlane.xlu0 %51
    %v53 = vsel %vm46, %v44, 0.0
    %54 = vadd.xlane.f32.xlu0 %v53
    %v55 = vpop.xlane.xlu0 %54
    %v56 = vsel %vm46, %v45, 0.0
    %57 = vadd.xlane.f32.xlu0 %v56
    %v58 = vpop.xlane.xlu0 %57
    %v63 = vlaneseq
    %v64 = vand.u32 %v63, 127
    %v65 = vlaneseq
    %v66 = vshrl.u32 %v65, 7
    %v67 = vsub.s32 %v64, %v66
    %v68 = vrot.slane %v49, %v67
    %v69 = vadd.s32 %v64, 4294967288
    %v70 = vlaneseq
    %v71 = vshrl.u32 %v70, 7
    %v72 = vsub.s32 %v69, %v71
    %v73 = vrot.slane %v52, %v72
    %vm74 = vcmask 130112
    %v75 = vsel %vm74, %v73, %v68
    %v76 = vlaneseq
    %v77 = vshrl.u32 %v76, 7
    %v78 = vsub.s32 %v64, %v77
    %v79 = vrot.slane %v55, %v78
    %v80 = vlaneseq
    %v81 = vshrl.u32 %v80, 7
    %v82 = vsub.s32 %v69, %v81
    %v83 = vrot.slane %v58, %v82
    %v84 = vsel %vm74, %v83, %v79
    %vm85 = vcmask 1041409
    %v86 = vsel %vm85, %v84, %v75
    %v88 = vadd.f32 %v41, %v86
    %vm89 = vcmask 123904
    %90 = vst.msk [vmem:[#allocation2] sm:$0x3] %vm89, %v88
    // Predicated region
    $region30: #{tpu_custom_call.1} parent=1 // pred_check
      %p91 = pneg %p35
    $region31: #{tpu_custom_call.1} parent=1 // pred_check_branch
      %93 = sbr.rel (%p91) target = $region33
    $region32: #{tpu_custom_call.1} parent=1 // pred_region
      %v94 = vld [vmem:[#allocation2] sm:$0x3]
      %v95 = vmul.f32 %v94, 0.0625
      %v96 = vld [vmem:[%s1] sm:$0xff]
      %v97 = vld [vmem:[%s1 + $0x8] sm:$0xff]
      %v98 = vld [vmem:[%s2] sm:$0x1]
      %v100 = vlaneseq
      %v101 = vshrl.u32 %v100, 7
      %v102 = vsub.s32 0, %v101
      %v103 = vrot.slane %v98, %v102
      %v106 = vsel %vm46, %v95, 0
      %108 = vmatprep.subr.mxu0 0.0
      %109 = vmatpush1.msra.mxu0 0.0
      %110 = vmatprep.subr.mxu0 0.0
      %111 = vmatpush1.msra.mxu0 0.0
      %112 = vmatprep.subr.mxu0 0.0
      %113 = vmatpush1.msra.mxu0 0.0
      %114 = vmatprep.subr.mxu0 0.0
      %115 = vmatpush1.msra.mxu0 0.0
      %116 = vmatprep.subr.mxu0 0.0
      %117 = vmatpush1.msra.mxu0 0.0
      %118 = vmatprep.subr.mxu0 0.0
      %119 = vmatpush1.msra.mxu0 0.0
      %120 = vmatprep.subr.mxu0 0.0
      %121 = vmatpush1.msra.mxu0 0.0
      %122 = vmatprep.subr.mxu0 0.0
      %123 = vmatpush1.msra.mxu0 0.0
      %124 = vmatprep.subr.mxu0 0.0
      %125 = vmatpush1.msra.mxu0 0.0
      %126 = vmatprep.subr.mxu0 0.0
      %127 = vmatpush1.msra.mxu0 0.0
      %128 = vmatprep.subr.mxu0 0.0
      %129 = vmatpush1.msra.mxu0 0.0
      %130 = vmatprep.subr.mxu0 0.0
      %131 = vmatpush1.msra.mxu0 0.0
      %132 = vmatprep.subr.mxu0 0.0
      %133 = vmatpush1.msra.mxu0 0.0
      %134 = vmatprep.subr.mxu0 0.0
      %135 = vmatpush1.msra.mxu0 0.0
      %136 = vmatprep.subr.mxu0 0.0
      %137 = vmatpush1.msra.mxu0 %v97
      %138 = vmatprep.subr.mxu0 0.0
      %139 = vmatpush1.msra.mxu0 %v96
      %140 = vmatprep.subr.mxu0 0.0
      %141 = vmatpush2.msra.mxu0 0.0
      %142 = vmatprep.subr.mxu0 0.0
      %143 = vmatpush2.msra.mxu0 0.0
      %144 = vmatprep.subr.mxu0 0.0
      %145 = vmatpush2.msra.mxu0 0.0
      %146 = vmatprep.subr.mxu0 0.0
      %147 = vmatpush2.msra.mxu0 0.0
      %148 = vmatprep.subr.mxu0 0.0
      %149 = vmatpush2.msra.mxu0 0.0
      %150 = vmatprep.subr.mxu0 0.0
      %151 = vmatpush2.msra.mxu0 0.0
      %152 = vmatprep.subr.mxu0 0.0
      %153 = vmatpush2.msra.mxu0 0.0
      %154 = vmatprep.subr.mxu0 0.0
      %155 = vmatpush2.msra.mxu0 0.0
      %156 = vmatprep.subr.mxu0 0.0
      %157 = vmatpush2.msra.mxu0 0.0
      %158 = vmatprep.subr.mxu0 0.0
      %159 = vmatpush2.msra.mxu0 0.0
      %160 = vmatprep.subr.mxu0 0.0
      %161 = vmatpush2.msra.mxu0 0.0
      %162 = vmatprep.subr.mxu0 0.0
      %163 = vmatpush2.msra.mxu0 0.0
      %164 = vmatprep.subr.mxu0 0.0
      %165 = vmatpush2.msra.mxu0 0.0
      %166 = vmatprep.subr.mxu0 0.0
      %167 = vmatpush2.msra.mxu0 0.0
      %168 = vmatprep.subr.mxu0 0.0
      %169 = vmatpush2.msra.mxu0 0.0
      %170 = vmatprep.subr.mxu0 0.0
      %171 = vmatpush2.msra.mxu0 0.0
      %172 = vmatprep.mubr.f32.mxu0 0.0
      %173 = vmatmul.mubr.f32.gmra.mxu0 %v106
      %v174 = vpop.f32.mrf.mxu0
      %v175 = vadd.f32 %v103, %v174
      %v176 = vpop.f32.mrf.mxu0
      %177 = vdwg.mxu0
      %v178 = vmax.f32 %v175, 0.0
      %v179 = vld [vmem:[%s3] sm:$0xff]
      %v180 = vld [vmem:[%s4] sm:$0x1]
      %v182 = vlaneseq
      %v183 = vshrl.u32 %v182, 7
      %v184 = vsub.s32 0, %v183
      %v185 = vrot.slane %v180, %v184
      %vm187 = vcmask 64512
      %v189 = vsel %vm187, %v178, 0
      %191 = vmatprep.subr.mxu0 0.0
      %192 = vmatpush1.msra.mxu0 0.0
      %193 = vmatprep.subr.mxu0 0.0
      %194 = vmatpush1.msra.mxu0 0.0
      %195 = vmatprep.subr.mxu0 0.0
      %196 = vmatpush1.msra.mxu0 0.0
      %197 = vmatprep.subr.mxu0 0.0
      %198 = vmatpush1.msra.mxu0 0.0
      %199 = vmatprep.subr.mxu0 0.0
      %200 = vmatpush1.msra.mxu0 0.0
      %201 = vmatprep.subr.mxu0 0.0
      %202 = vmatpush1.msra.mxu0 0.0
      %203 = vmatprep.subr.mxu0 0.0
      %204 = vmatpush1.msra.mxu0 0.0
      %205 = vmatprep.subr.mxu0 0.0
      %206 = vmatpush1.msra.mxu0 0.0
      %207 = vmatprep.subr.mxu0 0.0
      %208 = vmatpush1.msra.mxu0 0.0
      %209 = vmatprep.subr.mxu0 0.0
      %210 = vmatpush1.msra.mxu0 0.0
      %211 = vmatprep.subr.mxu0 0.0
      %212 = vmatpush1.msra.mxu0 0.0
      %213 = vmatprep.subr.mxu0 0.0
      %214 = vmatpush1.msra.mxu0 0.0
      %215 = vmatprep.subr.mxu0 0.0
      %216 = vmatpush1.msra.mxu0 0.0
      %217 = vmatprep.subr.mxu0 0.0
      %218 = vmatpush1.msra.mxu0 0.0
      %219 = vmatprep.subr.mxu0 0.0
      %220 = vmatpush1.msra.mxu0 0.0
      %221 = vmatprep.subr.mxu0 0.0
      %222 = vmatpush1.msra.mxu0 %v179
      %223 = vmatprep.subr.mxu0 0.0
      %224 = vmatpush2.msra.mxu0 0.0
      %225 = vmatprep.subr.mxu0 0.0
      %226 = vmatpush2.msra.mxu0 0.0
      %227 = vmatprep.subr.mxu0 0.0
      %228 = vmatpush2.msra.mxu0 0.0
      %229 = vmatprep.subr.mxu0 0.0
      %230 = vmatpush2.msra.mxu0 0.0
      %231 = vmatprep.subr.mxu0 0.0
      %232 = vmatpush2.msra.mxu0 0.0
      %233 = vmatprep.subr.mxu0 0.0
      %234 = vmatpush2.msra.mxu0 0.0
      %235 = vmatprep.subr.mxu0 0.0
      %236 = vmatpush2.msra.mxu0 0.0
      %237 = vmatprep.subr.mxu0 0.0
      %238 = vmatpush2.msra.mxu0 0.0
      %239 = vmatprep.subr.mxu0 0.0
      %240 = vmatpush2.msra.mxu0 0.0
      %241 = vmatprep.subr.mxu0 0.0
      %242 = vmatpush2.msra.mxu0 0.0
      %243 = vmatprep.subr.mxu0 0.0
      %244 = vmatpush2.msra.mxu0 0.0
      %245 = vmatprep.subr.mxu0 0.0
      %246 = vmatpush2.msra.mxu0 0.0
      %247 = vmatprep.subr.mxu0 0.0
      %248 = vmatpush2.msra.mxu0 0.0
      %249 = vmatprep.subr.mxu0 0.0
      %250 = vmatpush2.msra.mxu0 0.0
      %251 = vmatprep.subr.mxu0 0.0
      %252 = vmatpush2.msra.mxu0 0.0
      %253 = vmatprep.subr.mxu0 0.0
      %254 = vmatpush2.msra.mxu0 0.0
      %255 = vmatprep.mubr.f32.mxu0 0.0
      %256 = vmatmul.mubr.f32.gmra.mxu0 %v189
      %v257 = vpop.f32.mrf.mxu0
      %v258 = vadd.f32 %v185, %v257
      %v259 = vpop.f32.mrf.mxu0
      %260 = vdwg.mxu0
      %v261 = vxor.u32 %v258, 2147483648
      %v262 = vmul.f32 %v261, 1.442695
      %v263 = vpow.pop %v262
      %v264 = vadd.f32 %v263, 1.0
      %v265 = vrcp.pop %v264
      %v266 = vmul.f32 1.0, %v265
      %267 = vst.msk [vmem:[#allocation6] sm:$0x3] %vm89, %v266
    $region33: #{tpu_custom_call.1} parent=1 // pred_fallthru
      _
    // Predicated region
    $region34: #{tpu_custom_call.1} parent=1 // pred_check
      _
    $region35: #{tpu_custom_call.1} parent=1 // pred_check_branch
      %269 = sbr.rel (0) target = $region37
    $region36: #{tpu_custom_call.1} parent=1 // pred_region
      %s271 = ssub.s32 32, 32
      %272 = vsyncadd [#allocation5], %s271
      %s274 = sshll.u32 [#allocation6], 4
      %s275 = int_to_ptr.vmem [resolvable:$true] %s274
      %277 = dma.vmem_to_hbm [thread:$0]  %s275, 32, %s5, [#allocation5]
    $region37: #{tpu_custom_call.1} parent=1 // pred_fallthru
      _
    // Predicated region
    $region38: #{tpu_custom_call.1} parent=1 // pred_check
      _
    $region39: #{tpu_custom_call.1} parent=1 // pred_check_branch
      %279 = sbr.rel (0) target = $region41
    $region40: #{tpu_custom_call.1} parent=1 // pred_region
      %280 = dma.done [#allocation5], 32
    $region41: #{tpu_custom_call.1} parent=1 // pred_fallthru
      _
    %281 = vsyncpa [#allocation4], 1
    %282 = vsyncpa [#allocation5], 1

</llo_original>
